<compile_context>
chip_gen: v7x
topology: tpu7x:2x2x1
jax: 0.10.0
libtpu: 0.0.40
codegen_flags: <defaults>
</compile_context>

<pallas_src>
import functools

import jax
import jax.numpy as jnp
from jax.experimental import pallas as pl
from jax.experimental.pallas import tpu as pltpu


def _layernorm_kernel(x_ref, g_ref, o_ref, *, eps):
    # x_ref: (NB, C, T)   g_ref: (1, C, 1)   o_ref: (NB, C, T)
    x = x_ref[...].astype(jnp.float32)
    mean = jnp.mean(x, axis=1, keepdims=True)          # (NB, 1, T) sublane reduce
    xc = x - mean                                      # hoisted centered value
    var = jnp.mean(xc * xc, axis=1, keepdims=True)     # biased (unbiased=False)
    inv = jax.lax.rsqrt(var + eps)                     # EUP
    out = xc * inv * g_ref[...].astype(jnp.float32)
    o_ref[...] = out.astype(o_ref.dtype)


_LANE = 128
_VMEM_LIMIT_BYTES = 32 * 1024 * 1024     # explicit; safe on v5e/v6e/v7x
_BLOCK_F32_BUDGET = 4 * 1024 * 1024      # ~4 MiB f32 working set per block
                                         #   -> ~4x (dbl-buffered in+out) <= 16 MiB
_MAX_HW_TILE = 2048                      # keep pipeline depth for large images


def _round_up(v, m):
    return (v + m - 1) // m * m


def layer_norm(x, g):
    """x: (N, C, H, W); g: (1, C, 1, 1). Matches the torch LayerNorm module."""
    N, C, H, W = x.shape
    # eps switch exactly as in the torch forward (f32 -> 1e-5, else 1e-3).
    eps = 1e-05 if x.dtype == jnp.float32 else 1e-03

    HW = H * W
    HW_pad = _round_up(HW, _LANE)

    x_flat = x.reshape(N, C, HW)
    if HW_pad != HW:
        # Pad lanes so every block is lane-dense (unmasked stores). Each spatial
        # position normalizes independently over C, so padded columns are
        # harmless and simply cropped afterwards.
        x_flat = jnp.pad(x_flat, ((0, 0), (0, 0), (0, HW_pad - HW)))
    g_flat = g.reshape(1, C, 1)

    # ---- tile selection -----------------------------------------------------
    whole_f32_bytes = N * C * HW_pad * 4
    if whole_f32_bytes <= _BLOCK_F32_BUDGET:
        # Tiny problem: one block, one grid point (no per-step overhead).
        nb, hw_tile = N, HW_pad
    else:
        nb = 1
        # Largest 128-multiple lane tile whose f32 block fits the budget,
        # capped for pipeline depth, never below one vreg width.
        hw_tile = (_BLOCK_F32_BUDGET // (C * 4)) // _LANE * _LANE
        hw_tile = max(_LANE, min(hw_tile, _MAX_HW_TILE, HW_pad))
        # Make the grid divide evenly (HW_pad is a multiple of 128, so this
        # terminates at worst at hw_tile == 128).
        while HW_pad % hw_tile:
            hw_tile -= _LANE

    grid = (N // nb, HW_pad // hw_tile)

    dtype_bytes = jnp.dtype(x.dtype).itemsize
    cost = pl.CostEstimate(
        flops=7 * N * C * HW,
        transcendentals=N * HW,
        bytes_accessed=2 * N * C * HW * dtype_bytes
        + C * jnp.dtype(g.dtype).itemsize,
    )

    kernel = functools.partial(_layernorm_kernel, eps=eps)

    out_flat = pl.pallas_call(
        kernel,
        out_shape=jax.ShapeDtypeStruct((N, C, HW_pad), x.dtype),
        grid_spec=pltpu.PrefetchScalarGridSpec(
            num_scalar_prefetch=0,
            grid=grid,
            in_specs=[
                pl.BlockSpec((nb, C, hw_tile), lambda n, s: (n, 0, s)),
                pl.BlockSpec((1, C, 1), lambda n, s: (0, 0, 0)),
            ],
            out_specs=pl.BlockSpec((nb, C, hw_tile), lambda n, s: (n, 0, s)),
        ),
        compiler_params=pltpu.CompilerParams(
            dimension_semantics=("parallel", "parallel"),
            vmem_limit_bytes=_VMEM_LIMIT_BYTES,
        ),
        cost_estimate=cost,
    )(x_flat, g_flat)

    if HW_pad != HW:
        out_flat = out_flat[:, :, :HW]
    return out_flat.reshape(N, C, H, W)


if __name__ == "__main__":
    key = jax.random.PRNGKey(0)
    N, C, H, W = 2, 4, 16, 16
    x = jax.random.normal(key, (N, C, H, W), dtype=jnp.float32)

    # Parameter init exactly as nn.Parameter(torch.ones(1, dim, 1, 1))
    g = jnp.ones((1, C, 1, 1), dtype=jnp.float32)

    out = layer_norm(x, g)
    out = jax.block_until_ready(out)

    # Reference check (plain JAX, same math as the torch forward)
    eps = 1e-05
    mean = jnp.mean(x, axis=1, keepdims=True)
    var = jnp.mean((x - mean) ** 2, axis=1, keepdims=True)
    ref = (x - mean) * jax.lax.rsqrt(var + eps) * g
    assert jnp.allclose(out, ref, atol=1e-5, rtol=1e-5)

    print("KERNEL_OK")
</pallas_src>

<mosaic_0001>
module attributes {stable_mosaic.version = 11 : i64} {
  func.func @_layernorm_kernel(%arg0: i32, %arg1: i32, %arg2: memref<2x4x256xf32, #tpu.memory_space<vmem>>, %arg3: memref<1x4x1xf32, #tpu.memory_space<vmem>>, %arg4: memref<2x4x256xf32, #tpu.memory_space<vmem>>) attributes {dimension_semantics = [#tpu.dimension_semantics<parallel>, #tpu.dimension_semantics<parallel>], iteration_bounds = array<i64: 1, 1>, scalar_prefetch = 0 : i64, scratch_operands = 0 : i64, tpu.core_type = #tpu.core_type<tc>, window_params = [{transform_indices = @transform_0, window_bounds = array<i64: 2, 4, 256>}, {pipeline_mode = #tpu.pipeline_mode<synchronous>, transform_indices = @transform_1, window_bounds = array<i64: 1, 4, 1>}, {transform_indices = @transform_2, window_bounds = array<i64: 2, 4, 256>}]} {
    %c0 = arith.constant 0 : index
    %c0_0 = arith.constant 0 : index
    %c0_1 = arith.constant 0 : index
    %0 = vector.load %arg2[%c0, %c0_0, %c0_1] : memref<2x4x256xf32, #tpu.memory_space<vmem>>, vector<2x4x256xf32>
    %cst = arith.constant dense<0.000000e+00> : vector<2x256xf32>
    %1 = vector.multi_reduction <add>, %0, %cst [1] : vector<2x4x256xf32> to vector<2x256xf32>
    %2 = vector.shape_cast %1 : vector<2x256xf32> to vector<2x1x256xf32>
    %cst_2 = arith.constant 4.000000e+00 : f32
    %3 = vector.broadcast %cst_2 : f32 to vector<2x1x256xf32>
    %4 = arith.divf %2, %3 : vector<2x1x256xf32>
    %5 = vector.broadcast %4 : vector<2x1x256xf32> to vector<2x4x256xf32>
    %6 = arith.subf %0, %5 : vector<2x4x256xf32>
    %7 = arith.mulf %6, %6 : vector<2x4x256xf32>
    %cst_3 = arith.constant dense<0.000000e+00> : vector<2x256xf32>
    %8 = vector.multi_reduction <add>, %7, %cst_3 [1] : vector<2x4x256xf32> to vector<2x256xf32>
    %9 = vector.shape_cast %8 : vector<2x256xf32> to vector<2x1x256xf32>
    %cst_4 = arith.constant 4.000000e+00 : f32
    %10 = vector.broadcast %cst_4 : f32 to vector<2x1x256xf32>
    %11 = arith.divf %9, %10 : vector<2x1x256xf32>
    %cst_5 = arith.constant 9.99999974E-6 : f32
    %12 = vector.broadcast %cst_5 : f32 to vector<2x1x256xf32>
    %13 = arith.addf %11, %12 : vector<2x1x256xf32>
    %14 = math.rsqrt %13 : vector<2x1x256xf32>
    %15 = vector.broadcast %14 : vector<2x1x256xf32> to vector<2x4x256xf32>
    %16 = arith.mulf %6, %15 : vector<2x4x256xf32>
    %c0_6 = arith.constant 0 : index
    %c0_7 = arith.constant 0 : index
    %c0_8 = arith.constant 0 : index
    %17 = vector.load %arg3[%c0_6, %c0_7, %c0_8] : memref<1x4x1xf32, #tpu.memory_space<vmem>>, vector<1x4x1xf32>
    %18 = vector.broadcast %17 : vector<1x4x1xf32> to vector<2x4x256xf32>
    %19 = arith.mulf %16, %18 : vector<2x4x256xf32>
    %c0_9 = arith.constant 0 : index
    %c0_10 = arith.constant 0 : index
    %c0_11 = arith.constant 0 : index
    %20 = vector.load %arg4[%c0_9, %c0_10, %c0_11] : memref<2x4x256xf32, #tpu.memory_space<vmem>>, vector<2x4x256xf32>
    tpu.vector_store %arg4[%c0_9, %c0_10, %c0_11], %19 {strides = array<i32>} : memref<2x4x256xf32, #tpu.memory_space<vmem>>, vector<2x4x256xf32>,
    return
  }
  func.func @transform_0(%arg0: i32, %arg1: i32) -> (i32, i32, i32) {
    %c0_i32 = arith.constant 0 : i32
    %c0_i32_0 = arith.constant 0 : i32
    return %arg0, %c0_i32, %arg1 : i32, i32, i32
  }
  func.func @transform_1(%arg0: i32, %arg1: i32) -> (i32, i32, i32) {
    %c0_i32 = arith.constant 0 : i32
    %c0_i32_0 = arith.constant 0 : i32
    %c0_i32_1 = arith.constant 0 : i32
    %c0_i32_2 = arith.constant 0 : i32
    return %c0_i32, %c0_i32_0, %c0_i32_1 : i32, i32, i32
  }
  func.func @transform_2(%arg0: i32, %arg1: i32) -> (i32, i32, i32) {
    %c0_i32 = arith.constant 0 : i32
    %c0_i32_0 = arith.constant 0 : i32
    return %arg0, %c0_i32, %arg1 : i32, i32, i32
  }
}

</mosaic_0001>

<llo_original>
// kernel: tpu_custom_call.1
$region0: #{tpu_custom_call.1}
  #allocation0 [shape = 'u32[]', space=smem, size = 0x4, offset = 0x4, fixed_abs, tag = 'smem constant byte address 0x4 - core index']
  #allocation1 [shape = 'u32[144,128]{1,0:T(1,128)}', space=vmem, size = 0x12000, scoped, tag = 'internal scratch']
  %s0 = inlined_call_operand.hbm [shape: f32[2,4,256], index: 0, kind: input, shape index: {}]
  %s1 = inlined_call_operand.vmem [shape: f32[1,4,1], index: 1, kind: input, shape index: {}]
  %s2 = inlined_call_operand.hbm [shape: f32[2,4,256], index: 2, kind: output, shape index: {}]
  %s3 = sld [smem:[#allocation0]]
  $region22: #{tpu_custom_call.1} parent=0
    _
  %s5 = ssub.s32 1, %s3
  %s6 = scalar_select 0, %s5, %s3
  $region1: #{tpu_custom_call.1} parent=0
    #allocation2 [shape = 'u8[8192]{0}', space=vmem, size = 0x2000, scoped, tag = 'input window, operand 0, single buffered']
    #allocation3 [shape = 's32[1]{0}', space=sflag, size = 0x4, scoped, tag = 'scoped memory for tpu_custom_call.1']
    #allocation4 [shape = 's32[1]{0}', space=sflag, size = 0x4, scoped, tag = 'scoped memory for tpu_custom_call.1']
    #allocation5 [shape = 'u8[8192]{0}', space=vmem, size = 0x2000, scoped, tag = 'output window, operand 0, single buffered']
    %7 = vsyncpa [#allocation3], 0
    %8 = vsyncpa [#allocation4], 0
    // Predicated region
    $region2: #{tpu_custom_call.1} parent=1 // pred_check
      _
    $region3: #{tpu_custom_call.1} parent=1 // pred_check_branch
      %10 = sbr.rel (0) target = $region5
    $region4: #{tpu_custom_call.1} parent=1 // pred_region
      %s12 = ssub.s32 256, 256
      %13 = vsyncadd [#allocation3], %s12
      %s14 = sshll.u32 [#allocation2], 4
      %s15 = int_to_ptr.vmem [resolvable:$true] %s14
      %20 = dma.hbm_to_vmem [thread:$0]  %s0, 256, %s15, [#allocation3], 128, 128, 8
    $region5: #{tpu_custom_call.1} parent=1 // pred_fallthru
      _
    // Predicated region
    $region6: #{tpu_custom_call.1} parent=1 // pred_check
      _
    $region7: #{tpu_custom_call.1} parent=1 // pred_check_branch
      %22 = sbr.rel (0) target = $region9
    $region8: #{tpu_custom_call.1} parent=1 // pred_region
      _
    $region9: #{tpu_custom_call.1} parent=1 // pred_fallthru
      _
    // Predicated region
    $region10: #{tpu_custom_call.1} parent=1 // pred_check
      _
    $region11: #{tpu_custom_call.1} parent=1 // pred_check_branch
      %24 = sbr.rel (0) target = $region13
    $region12: #{tpu_custom_call.1} parent=1 // pred_region
      %25 = dma.done [#allocation3], 256
    $region13: #{tpu_custom_call.1} parent=1 // pred_fallthru
      _
    %v26 = vld [vmem:[#allocation2] sm:$0xff]
    %v27 = vld [vmem:[#allocation2 + $0x8] sm:$0xff]
    %v30 = vcombine.high %v26, %v26
    %v31 = vcombine.high %v27, %v27
    %vm34 = vcmask 1043456
    %v35 = vsel %vm34, %v26, 0.0
    %v36 = vrot.slane %v35, 4
    %v37 = vadd.f32 %v35, %v36
    %v38 = vrot.slane %v37, 2
    %v39 = vadd.f32 %v37, %v38
    %v40 = vrot.slane %v39, 1
    %v41 = vadd.f32 %v39, %v40
    %v42 = vsel %vm34, %v30, 0.0
    %v43 = vrot.slane %v42, 4
    %v44 = vadd.f32 %v42, %v43
    %v45 = vrot.slane %v44, 2
    %v46 = vadd.f32 %v44, %v45
    %v47 = vrot.slane %v46, 1
    %v48 = vadd.f32 %v46, %v47
    %v49 = vsel %vm34, %v27, 0.0
    %v50 = vrot.slane %v49, 4
    %v51 = vadd.f32 %v49, %v50
    %v52 = vrot.slane %v51, 2
    %v53 = vadd.f32 %v51, %v52
    %v54 = vrot.slane %v53, 1
    %v55 = vadd.f32 %v53, %v54
    %v56 = vsel %vm34, %v31, 0.0
    %v57 = vrot.slane %v56, 4
    %v58 = vadd.f32 %v56, %v57
    %v59 = vrot.slane %v58, 2
    %v60 = vadd.f32 %v58, %v59
    %v61 = vrot.slane %v60, 1
    %v62 = vadd.f32 %v60, %v61
    %v63 = vrcp.pop 4.0
    %v64 = vmul.f32 %v41, %v63
    %v65 = vmul.f32 %v48, %v63
    %v66 = vmul.f32 %v55, %v63
    %v67 = vmul.f32 %v62, %v63
    %v72 = vcombine.low %v64, %v65
    %v73 = vcombine.low %v66, %v67
    %v76 = vsub.f32 %v26, %v72
    %v77 = vsub.f32 %v27, %v73
    %v78 = vmul.f32 %v76, %v76
    %v79 = vmul.f32 %v77, %v77
    %v82 = vcombine.high %v78, %v78
    %v83 = vcombine.high %v79, %v79
    %v86 = vsel %vm34, %v78, 0.0
    %v87 = vrot.slane %v86, 4
    %v88 = vadd.f32 %v86, %v87
    %v89 = vrot.slane %v88, 2
    %v90 = vadd.f32 %v88, %v89
    %v91 = vrot.slane %v90, 1
    %v92 = vadd.f32 %v90, %v91
    %v93 = vsel %vm34, %v82, 0.0
    %v94 = vrot.slane %v93, 4
    %v95 = vadd.f32 %v93, %v94
    %v96 = vrot.slane %v95, 2
    %v97 = vadd.f32 %v95, %v96
    %v98 = vrot.slane %v97, 1
    %v99 = vadd.f32 %v97, %v98
    %v100 = vsel %vm34, %v79, 0.0
    %v101 = vrot.slane %v100, 4
    %v102 = vadd.f32 %v100, %v101
    %v103 = vrot.slane %v102, 2
    %v104 = vadd.f32 %v102, %v103
    %v105 = vrot.slane %v104, 1
    %v106 = vadd.f32 %v104, %v105
    %v107 = vsel %vm34, %v83, 0.0
    %v108 = vrot.slane %v107, 4
    %v109 = vadd.f32 %v107, %v108
    %v110 = vrot.slane %v109, 2
    %v111 = vadd.f32 %v109, %v110
    %v112 = vrot.slane %v111, 1
    %v113 = vadd.f32 %v111, %v112
    %v114 = vmul.f32 %v92, %v63
    %v115 = vmul.f32 %v99, %v63
    %v116 = vmul.f32 %v106, %v63
    %v117 = vmul.f32 %v113, %v63
    %v118 = vadd.f32 %v114, 1e-05
    %v119 = vadd.f32 %v115, 1e-05
    %v120 = vadd.f32 %v116, 1e-05
    %v121 = vadd.f32 %v117, 1e-05
    %v122 = vrsqrt.pop %v118
    %v123 = vrsqrt.pop %v119
    %v124 = vrsqrt.pop %v120
    %v125 = vrsqrt.pop %v121
    %v130 = vcombine.low %v122, %v123
    %v131 = vcombine.low %v124, %v125
    %v134 = vmul.f32 %v76, %v130
    %v135 = vmul.f32 %v77, %v131
    %v136 = vld [vmem:[%s1] sm:$0xf]
    %138 = vset.pattern.permute.xlu0 0
    %139 = vperm.xlu0 %138, %v136
    %v140 = vpop.permute.xlu0 %139
    %v142 = vunpack.c.l.s4 839922192
    %v143 = vunpack.c.0.s8 %v142
    %v144 = vlaneseq
    %v145 = vshrl.u32 %v144, 7
    %v146 = vsub.s32 %v143, %v145
    %v147 = vrot.slane %v140, %v146
    %v149 = vmul.f32 %v134, %v147
    %v150 = vmul.f32 %v135, %v147
    %151 = vst [vmem:[#allocation5] sm:$0xff] %v149
    %152 = vst [vmem:[#allocation5 + $0x8] sm:$0xff] %v150
    // Predicated region
    $region14: #{tpu_custom_call.1} parent=1 // pred_check
      _
    $region15: #{tpu_custom_call.1} parent=1 // pred_check_branch
      %154 = sbr.rel (0) target = $region17
    $region16: #{tpu_custom_call.1} parent=1 // pred_region
      %s156 = ssub.s32 256, 256
      %157 = vsyncadd [#allocation4], %s156
      %s158 = sshll.u32 [#allocation5], 4
      %s159 = int_to_ptr.vmem [resolvable:$true] %s158
      %164 = dma.vmem_to_hbm [thread:$0]  %s159, 256, %s2, [#allocation4], 128, 128, 8
    $region17: #{tpu_custom_call.1} parent=1 // pred_fallthru
      _
    // Predicated region
    $region18: #{tpu_custom_call.1} parent=1 // pred_check
      _
    $region19: #{tpu_custom_call.1} parent=1 // pred_check_branch
      %166 = sbr.rel (0) target = $region21
    $region20: #{tpu_custom_call.1} parent=1 // pred_region
      %167 = dma.done [#allocation4], 256
    $region21: #{tpu_custom_call.1} parent=1 // pred_fallthru
      _
    %168 = vsyncpa [#allocation3], 1
    %169 = vsyncpa [#allocation4], 1

</llo_original>
